<compile_context>
chip_gen: v6e
topology: v6e:2x2x1
jax: 0.10.0
libtpu: 0.0.40
codegen_flags: <defaults>
</compile_context>

<pallas_src>
import functools

import jax
import jax.numpy as jnp
import numpy as np
from jax.experimental import pallas as pl
from jax.experimental.pallas import tpu as pltpu

NEG_SLOPE = 0.2
BN_EPS = 1e-5


def _leaky_relu(h):
    return jnp.where(h >= 0, h, NEG_SLOPE * h)


def gcn_kernel(adj_ref, x_ref,
               w0_ref, w1_ref, w2_ref,
               b0_ref, b1_ref, b2_ref,
               out_ref):
    """One batch element per grid step.

    adj_ref: (1, N, N)      bf16 row-normalized adjacency
    x_ref  : (1, N, C_in)   bf16 node features
    wK_ref : (C_k, C_{k+1}) bf16 weights with BN scale folded into columns
    bK_ref : (1, C_{k+1})   f32  folded BN bias
    out_ref: (1, N, C_out)  f32
    """
    adj = adj_ref[0]                       # (N, N)    bf16
    h = x_ref[0]                           # (N, C_in) bf16

    def layer(h_bf16, w_ref, b_ref):
        # Reassociated: (adj @ h) @ W — aggregate the narrow feature dim first.
        agg = jnp.dot(adj, h_bf16, preferred_element_type=jnp.float32)
        z = jnp.dot(agg.astype(jnp.bfloat16), w_ref[...],
                    preferred_element_type=jnp.float32)
        return _leaky_relu(z + b_ref[...])

    h0 = layer(h, w0_ref, b0_ref)                          # (N, 64)    f32
    h1 = layer(h0.astype(jnp.bfloat16), w1_ref, b1_ref)    # (N, 128)   f32
    h2 = layer(h1.astype(jnp.bfloat16), w2_ref, b2_ref)    # (N, C_out) f32

    out_ref[0] = h2.astype(out_ref.dtype)


def my_build_graph(x, k):
    """kNN graph from x: (B, C, N) -> row-normalized adjacency (B, N, N).

    # TODO(synk): the original MapTR my_build_graph source is not provided;
    # this is the canonical kNN (including self) binary adjacency with row
    # normalization used by point-cloud GCNs.  Tie-breaking may differ.
    """
    B, C, N = x.shape
    pts = jnp.transpose(x, (0, 2, 1))                                   # (B, N, C)
    d = jnp.sum((pts[:, :, None, :] - pts[:, None, :, :]) ** 2, -1)     # (B, N, N)
    _, idx = jax.lax.top_k(-d, k)                                       # (B, N, k)
    adj = jnp.sum(jax.nn.one_hot(idx, N, dtype=jnp.float32), axis=2)    # (B, N, N)
    adj = adj / jnp.sum(adj, axis=-1, keepdims=True)
    return adj.astype(jnp.float32)


def init_params(key, input_dim=2, output_dim=1024):
    """Deterministic synthetic init matching the module's parameter shapes.

    BatchNorm is folded in inference form (running stats); the per-channel BN
    scale is folded into the weight columns (exact), the bias kept separate.
    Weights are stored in bf16 (MXU operand dtype); biases stay f32.
    """
    dims = [input_dim, 64, 128, output_dim]
    keys = jax.random.split(key, 15)
    params = {}
    for i in range(3):
        fan_in, fan_out = dims[i], dims[i + 1]
        bound = 1.0 / float(fan_in) ** 0.5
        w = jax.random.uniform(
            keys[5 * i], (fan_in, fan_out), jnp.float32, -bound, bound)
        gamma = jax.random.uniform(keys[5 * i + 1], (fan_out,), jnp.float32, 0.5, 1.5)
        beta = jax.random.uniform(keys[5 * i + 2], (fan_out,), jnp.float32, -0.1, 0.1)
        r_mean = jax.random.uniform(keys[5 * i + 3], (fan_out,), jnp.float32, -0.1, 0.1)
        r_var = jax.random.uniform(keys[5 * i + 4], (fan_out,), jnp.float32, 0.5, 1.5)
        scale = gamma * jax.lax.rsqrt(r_var + BN_EPS)
        bias = beta - r_mean * scale
        params[f"w{i}"] = (w * scale[None, :]).astype(jnp.bfloat16)
        params[f"b{i}"] = bias.reshape(1, fan_out).astype(jnp.float32)
    return params


@functools.partial(jax.jit, static_argnames=("k",))
def gcn_feature_extractor(x, params, k=8):
    """x: (B, C_in, N) float32  ->  (B, C_out, N) float32 (PyTorch layout)."""
    B, C_in, N = x.shape
    out_dim = params["w2"].shape[1]

    adj = my_build_graph(x, k).astype(jnp.bfloat16)          # (B, N, N)    glue
    x_t = jnp.transpose(x, (0, 2, 1)).astype(jnp.bfloat16)   # (B, N, C_in) glue

    def full(shape):
        n = len(shape)
        return pl.BlockSpec(shape, lambda b, _n=n: (0,) * _n)

    grid_spec = pltpu.PrefetchScalarGridSpec(
        num_scalar_prefetch=0,
        grid=(B,),
        in_specs=[
            pl.BlockSpec((1, N, N), lambda b: (b, 0, 0)),       # adjacency
            pl.BlockSpec((1, N, C_in), lambda b: (b, 0, 0)),    # node features
            full(params["w0"].shape), full(params["w1"].shape), full(params["w2"].shape),
            full(params["b0"].shape), full(params["b1"].shape), full(params["b2"].shape),
        ],
        out_specs=pl.BlockSpec((1, N, out_dim), lambda b: (b, 0, 0)),
    )

    out = pl.pallas_call(
        gcn_kernel,
        out_shape=jax.ShapeDtypeStruct((B, N, out_dim), jnp.float32),
        grid_spec=grid_spec,
        compiler_params=pltpu.CompilerParams(
            dimension_semantics=("parallel",)),   # v7x: megacore shards batch
    )(adj, x_t,
      params["w0"], params["w1"], params["w2"],
      params["b0"], params["b1"], params["b2"])

    return jnp.transpose(out, (0, 2, 1))      # (B, C_out, N) — PyTorch layout


def _reference(x, params, k=8):
    """Pure-JAX reference mirroring the kernel's dtype path exactly."""
    adj = my_build_graph(x, k).astype(jnp.bfloat16)
    h = jnp.transpose(x, (0, 2, 1)).astype(jnp.bfloat16)
    out = h
    for i in range(3):
        agg = jnp.einsum("bnm,bmc->bnc", adj, out,
                         preferred_element_type=jnp.float32)
        z = jnp.einsum("bnc,cd->bnd", agg.astype(jnp.bfloat16), params[f"w{i}"],
                       preferred_element_type=jnp.float32)
        a = _leaky_relu(z + params[f"b{i}"][None])
        out = a.astype(jnp.bfloat16) if i < 2 else a
    return jnp.transpose(out, (0, 2, 1))


if __name__ == "__main__":
    key = jax.random.PRNGKey(0)
    k_x, k_p = jax.random.split(key)

    B, C_IN, N = 2, 2, 16          # small shapes: batch=2, 2-D points, 16 nodes
    OUT_DIM = 1024                 # module default output_dim

    x = jax.random.normal(k_x, (B, C_IN, N), dtype=jnp.float32)
    params = init_params(k_p, input_dim=C_IN, output_dim=OUT_DIM)

    out = gcn_feature_extractor(x, params, k=8)
    jax.block_until_ready(out)

    assert out.shape == (B, OUT_DIM, N), out.shape
    assert out.dtype == jnp.float32

    ref = jax.jit(functools.partial(_reference, k=8))(x, params)
    jax.block_until_ready(ref)
    np.testing.assert_allclose(np.asarray(out), np.asarray(ref),
                               rtol=5e-2, atol=5e-2)

    print("KERNEL_OK")
</pallas_src>

<mosaic_0001>
module attributes {stable_mosaic.version = 11 : i64} {
  func.func @gcn_kernel(%arg0: i32, %arg1: memref<1x16x16xbf16, #tpu.memory_space<vmem>>, %arg2: memref<1x16x2xbf16, #tpu.memory_space<vmem>>, %arg3: memref<2x64xbf16, #tpu.memory_space<vmem>>, %arg4: memref<64x128xbf16, #tpu.memory_space<vmem>>, %arg5: memref<128x1024xbf16, #tpu.memory_space<vmem>>, %arg6: memref<1x64xf32, #tpu.memory_space<vmem>>, %arg7: memref<1x128xf32, #tpu.memory_space<vmem>>, %arg8: memref<1x1024xf32, #tpu.memory_space<vmem>>, %arg9: memref<1x16x1024xf32, #tpu.memory_space<vmem>>) attributes {dimension_semantics = [#tpu.dimension_semantics<parallel>], iteration_bounds = array<i64: 2>, scalar_prefetch = 0 : i64, scratch_operands = 0 : i64, tpu.core_type = #tpu.core_type<tc>, window_params = [{transform_indices = @transform_0, window_bounds = array<i64: 1, 16, 16>}, {transform_indices = @transform_1, window_bounds = array<i64: 1, 16, 2>}, {pipeline_mode = #tpu.pipeline_mode<synchronous>, transform_indices = @transform_2, window_bounds = array<i64: 2, 64>}, {pipeline_mode = #tpu.pipeline_mode<synchronous>, transform_indices = @transform_3, window_bounds = array<i64: 64, 128>}, {pipeline_mode = #tpu.pipeline_mode<synchronous>, transform_indices = @transform_4, window_bounds = array<i64: 128, 1024>}, {pipeline_mode = #tpu.pipeline_mode<synchronous>, transform_indices = @transform_5, window_bounds = array<i64: 1, 64>}, {pipeline_mode = #tpu.pipeline_mode<synchronous>, transform_indices = @transform_6, window_bounds = array<i64: 1, 128>}, {pipeline_mode = #tpu.pipeline_mode<synchronous>, transform_indices = @transform_7, window_bounds = array<i64: 1, 1024>}, {transform_indices = @transform_8, window_bounds = array<i64: 1, 16, 1024>}]} {
    %c0 = arith.constant 0 : index
    %c0_0 = arith.constant 0 : index
    %c0_1 = arith.constant 0 : index
    %0 = vector.load %arg1[%c0, %c0_0, %c0_1] : memref<1x16x16xbf16, #tpu.memory_space<vmem>>, vector<1x16x16xbf16>
    %1 = vector.shape_cast %0 : vector<1x16x16xbf16> to vector<16x16xbf16>
    %c0_2 = arith.constant 0 : index
    %c0_3 = arith.constant 0 : index
    %c0_4 = arith.constant 0 : index
    %2 = vector.load %arg2[%c0_2, %c0_3, %c0_4] : memref<1x16x2xbf16, #tpu.memory_space<vmem>>, vector<1x16x2xbf16>
    %3 = vector.shape_cast %2 : vector<1x16x2xbf16> to vector<16x2xbf16>
    %cst = arith.constant dense<0.000000e+00> : vector<16x2xf32>
    %4 = tpu.matmul %1, %3, %cst {dimension_numbers = #tpu.dot_dimension_numbers<[1], [0], [0], [1], [0, 0, 1, 1], [], []>} : vector<16x16xbf16>, vector<16x2xbf16>, vector<16x2xf32> -> vector<16x2xf32>
    %5 = arith.truncf %4 : vector<16x2xf32> to vector<16x2xbf16>
    %c0_5 = arith.constant 0 : index
    %c0_6 = arith.constant 0 : index
    %6 = vector.load %arg3[%c0_5, %c0_6] : memref<2x64xbf16, #tpu.memory_space<vmem>>, vector<2x64xbf16>
    %cst_7 = arith.constant dense<0.000000e+00> : vector<16x64xf32>
    %7 = tpu.matmul %5, %6, %cst_7 {dimension_numbers = #tpu.dot_dimension_numbers<[1], [0], [0], [1], [0, 0, 1, 1], [], []>} : vector<16x2xbf16>, vector<2x64xbf16>, vector<16x64xf32> -> vector<16x64xf32>
    %c0_8 = arith.constant 0 : index
    %c0_9 = arith.constant 0 : index
    %8 = vector.load %arg6[%c0_8, %c0_9] : memref<1x64xf32, #tpu.memory_space<vmem>>, vector<1x64xf32>
    %9 = vector.broadcast %8 : vector<1x64xf32> to vector<16x64xf32>
    %10 = arith.addf %7, %9 : vector<16x64xf32>
    %cst_10 = arith.constant 0.000000e+00 : f32
    %11 = vector.broadcast %cst_10 : f32 to vector<16x64xf32>
    %12 = arith.cmpf oge, %10, %11 : vector<16x64xf32>
    %cst_11 = arith.constant 2.000000e-01 : f32
    %13 = vector.broadcast %cst_11 : f32 to vector<16x64xf32>
    %14 = arith.mulf %13, %10 : vector<16x64xf32>
    %15 = arith.select %12, %10, %14 : vector<16x64xi1>, vector<16x64xf32>
    %16 = arith.truncf %15 : vector<16x64xf32> to vector<16x64xbf16>
    %cst_12 = arith.constant dense<0.000000e+00> : vector<16x64xf32>
    %17 = tpu.matmul %1, %16, %cst_12 {dimension_numbers = #tpu.dot_dimension_numbers<[1], [0], [0], [1], [0, 0, 1, 1], [], []>} : vector<16x16xbf16>, vector<16x64xbf16>, vector<16x64xf32> -> vector<16x64xf32>
    %18 = arith.truncf %17 : vector<16x64xf32> to vector<16x64xbf16>
    %c0_13 = arith.constant 0 : index
    %c0_14 = arith.constant 0 : index
    %19 = vector.load %arg4[%c0_13, %c0_14] : memref<64x128xbf16, #tpu.memory_space<vmem>>, vector<64x128xbf16>
    %cst_15 = arith.constant dense<0.000000e+00> : vector<16x128xf32>
    %20 = tpu.matmul %18, %19, %cst_15 {dimension_numbers = #tpu.dot_dimension_numbers<[1], [0], [0], [1], [0, 0, 1, 1], [], []>} : vector<16x64xbf16>, vector<64x128xbf16>, vector<16x128xf32> -> vector<16x128xf32>
    %c0_16 = arith.constant 0 : index
    %c0_17 = arith.constant 0 : index
    %21 = vector.load %arg7[%c0_16, %c0_17] : memref<1x128xf32, #tpu.memory_space<vmem>>, vector<1x128xf32>
    %22 = vector.broadcast %21 : vector<1x128xf32> to vector<16x128xf32>
    %23 = arith.addf %20, %22 : vector<16x128xf32>
    %cst_18 = arith.constant 0.000000e+00 : f32
    %24 = vector.broadcast %cst_18 : f32 to vector<16x128xf32>
    %25 = arith.cmpf oge, %23, %24 : vector<16x128xf32>
    %cst_19 = arith.constant 2.000000e-01 : f32
    %26 = vector.broadcast %cst_19 : f32 to vector<16x128xf32>
    %27 = arith.mulf %26, %23 : vector<16x128xf32>
    %28 = arith.select %25, %23, %27 : vector<16x128xi1>, vector<16x128xf32>
    %29 = arith.truncf %28 : vector<16x128xf32> to vector<16x128xbf16>
    %cst_20 = arith.constant dense<0.000000e+00> : vector<16x128xf32>
    %30 = tpu.matmul %1, %29, %cst_20 {dimension_numbers = #tpu.dot_dimension_numbers<[1], [0], [0], [1], [0, 0, 1, 1], [], []>} : vector<16x16xbf16>, vector<16x128xbf16>, vector<16x128xf32> -> vector<16x128xf32>
    %31 = arith.truncf %30 : vector<16x128xf32> to vector<16x128xbf16>
    %c0_21 = arith.constant 0 : index
    %c0_22 = arith.constant 0 : index
    %32 = vector.load %arg5[%c0_21, %c0_22] : memref<128x1024xbf16, #tpu.memory_space<vmem>>, vector<128x1024xbf16>
    %cst_23 = arith.constant dense<0.000000e+00> : vector<16x1024xf32>
    %33 = tpu.matmul %31, %32, %cst_23 {dimension_numbers = #tpu.dot_dimension_numbers<[1], [0], [0], [1], [0, 0, 1, 1], [], []>} : vector<16x128xbf16>, vector<128x1024xbf16>, vector<16x1024xf32> -> vector<16x1024xf32>
    %c0_24 = arith.constant 0 : index
    %c0_25 = arith.constant 0 : index
    %34 = vector.load %arg8[%c0_24, %c0_25] : memref<1x1024xf32, #tpu.memory_space<vmem>>, vector<1x1024xf32>
    %35 = vector.broadcast %34 : vector<1x1024xf32> to vector<16x1024xf32>
    %36 = arith.addf %33, %35 : vector<16x1024xf32>
    %cst_26 = arith.constant 0.000000e+00 : f32
    %37 = vector.broadcast %cst_26 : f32 to vector<16x1024xf32>
    %38 = arith.cmpf oge, %36, %37 : vector<16x1024xf32>
    %cst_27 = arith.constant 2.000000e-01 : f32
    %39 = vector.broadcast %cst_27 : f32 to vector<16x1024xf32>
    %40 = arith.mulf %39, %36 : vector<16x1024xf32>
    %41 = arith.select %38, %36, %40 : vector<16x1024xi1>, vector<16x1024xf32>
    %c0_28 = arith.constant 0 : index
    %c0_29 = arith.constant 0 : index
    %c0_30 = arith.constant 0 : index
    %42 = vector.load %arg9[%c0_28, %c0_29, %c0_30] : memref<1x16x1024xf32, #tpu.memory_space<vmem>>, vector<1x16x1024xf32>
    %43 = vector.shape_cast %42 : vector<1x16x1024xf32> to vector<16x1024xf32>
    %44 = vector.shape_cast %41 : vector<16x1024xf32> to vector<1x16x1024xf32>
    tpu.vector_store %arg9[%c0_28, %c0_29, %c0_30], %44 {strides = array<i32>} : memref<1x16x1024xf32, #tpu.memory_space<vmem>>, vector<1x16x1024xf32>,
    return
  }
  func.func @transform_0(%arg0: i32) -> (i32, i32, i32) {
    %c0_i32 = arith.constant 0 : i32
    %c0_i32_0 = arith.constant 0 : i32
    %c0_i32_1 = arith.constant 0 : i32
    return %arg0, %c0_i32, %c0_i32_0 : i32, i32, i32
  }
  func.func @transform_1(%arg0: i32) -> (i32, i32, i32) {
    %c0_i32 = arith.constant 0 : i32
    %c0_i32_0 = arith.constant 0 : i32
    %c0_i32_1 = arith.constant 0 : i32
    return %arg0, %c0_i32, %c0_i32_0 : i32, i32, i32
  }
  func.func @transform_2(%arg0: i32) -> (i32, i32) {
    %c0_i32 = arith.constant 0 : i32
    %c0_i32_0 = arith.constant 0 : i32
    %c0_i32_1 = arith.constant 0 : i32
    return %c0_i32, %c0_i32_0 : i32, i32
  }
  func.func @transform_3(%arg0: i32) -> (i32, i32) {
    %c0_i32 = arith.constant 0 : i32
    %c0_i32_0 = arith.constant 0 : i32
    %c0_i32_1 = arith.constant 0 : i32
    return %c0_i32, %c0_i32_0 : i32, i32
  }
  func.func @transform_4(%arg0: i32) -> (i32, i32) {
    %c0_i32 = arith.constant 0 : i32
    %c0_i32_0 = arith.constant 0 : i32
    %c0_i32_1 = arith.constant 0 : i32
    return %c0_i32, %c0_i32_0 : i32, i32
  }
  func.func @transform_5(%arg0: i32) -> (i32, i32) {
    %c0_i32 = arith.constant 0 : i32
    %c0_i32_0 = arith.constant 0 : i32
    %c0_i32_1 = arith.constant 0 : i32
    return %c0_i32, %c0_i32_0 : i32, i32
  }
  func.func @transform_6(%arg0: i32) -> (i32, i32) {
    %c0_i32 = arith.constant 0 : i32
    %c0_i32_0 = arith.constant 0 : i32
    %c0_i32_1 = arith.constant 0 : i32
    return %c0_i32, %c0_i32_0 : i32, i32
  }
  func.func @transform_7(%arg0: i32) -> (i32, i32) {
    %c0_i32 = arith.constant 0 : i32
    %c0_i32_0 = arith.constant 0 : i32
    %c0_i32_1 = arith.constant 0 : i32
    return %c0_i32, %c0_i32_0 : i32, i32
  }
  func.func @transform_8(%arg0: i32) -> (i32, i32, i32) {
    %c0_i32 = arith.constant 0 : i32
    %c0_i32_0 = arith.constant 0 : i32
    %c0_i32_1 = arith.constant 0 : i32
    return %arg0, %c0_i32, %c0_i32_0 : i32, i32, i32
  }
}

</mosaic_0001>

<llo_original>
// kernel: neg.1
$region0: #{neg.1}
  #allocation0 [shape = 's32[1]{0}', space=sflag, size = 0x4, scoped, tag = 'scoped memory for neg.1']
  %s0 = inlined_call_operand.vmem [shape: f32[2,16,16], index: 0, kind: input, shape index: {}]
  %s1 = inlined_call_operand.vmem [shape: f32[2,16,16], index: 1, kind: output, shape index: {}]
  %v2 = vld [vmem:[%s0] sm:$0xff]
  %3 = xla_tuple %v2
  %4 = xla_tuple %3
  %v5 = vxor.u32 %v2, 2147483648
  %6 = xla_tuple %v5
  %7 = vst [vmem:[%s1] sm:$0xff] %v5
  %s8 = scalar_lea.vmem %s0, 16
  %v9 = vld [vmem:[%s8] sm:$0xff]
  %10 = xla_tuple %v9
  %11 = xla_tuple %10
  %v12 = vxor.u32 %v9, 2147483648
  %13 = xla_tuple %v12
  %s14 = scalar_lea.vmem %s1, 16
  %15 = vst [vmem:[%s14] sm:$0xff] %v12
  %s16 = scalar_lea.vmem %s0, 8
  %v17 = vld [vmem:[%s16] sm:$0xff]
  %18 = xla_tuple %v17
  %19 = xla_tuple %18
  %v20 = vxor.u32 %v17, 2147483648
  %21 = xla_tuple %v20
  %s22 = scalar_lea.vmem %s1, 8
  %23 = vst [vmem:[%s22] sm:$0xff] %v20
  %s24 = scalar_lea.vmem %s0, 24
  %v25 = vld [vmem:[%s24] sm:$0xff]
  %26 = xla_tuple %v25
  %27 = xla_tuple %26
  %v28 = vxor.u32 %v25, 2147483648
  %29 = xla_tuple %v28
  %s30 = scalar_lea.vmem %s1, 24
  %31 = vst [vmem:[%s30] sm:$0xff] %v28

// kernel: gcn_feature_extractor.1
$region0: #{gcn_feature_extractor.1}
  #allocation0 [shape = 'u32[]', space=smem, size = 0x4, offset = 0x4, fixed_abs, tag = 'smem constant byte address 0x4 - core index']
  #allocation1 [shape = 'u32[144,128]{1,0:T(1,128)}', space=vmem, size = 0x12000, scoped, tag = 'internal scratch']
  %s0 = inlined_call_operand.vmem [shape: bf16[2,16,16], index: 0, kind: input, shape index: {}]
  %s1 = inlined_call_operand.vmem [shape: bf16[2,16,2], index: 1, kind: input, shape index: {}]
  %s2 = inlined_call_operand.vmem [shape: bf16[2,64], index: 2, kind: input, shape index: {}]
  %s3 = inlined_call_operand.vmem [shape: bf16[64,128], index: 3, kind: input, shape index: {}]
  %s4 = inlined_call_operand.vmem [shape: bf16[128,1024], index: 4, kind: input, shape index: {}]
  %s5 = inlined_call_operand.vmem [shape: f32[1,64], index: 5, kind: input, shape index: {}]
  %s6 = inlined_call_operand.vmem [shape: f32[1,128], index: 6, kind: input, shape index: {}]
  %s7 = inlined_call_operand.vmem [shape: f32[1,1024], index: 7, kind: input, shape index: {}]
  %s8 = inlined_call_operand.hbm [shape: f32[2,16,1024], index: 8, kind: output, shape index: {}]
  %s9 = sld [smem:[#allocation0]]
  $region65: #{gcn_feature_extractor.1} parent=0
    _
  %s11 = ssub.s32 1, %s9
  %s12 = scalar_select 0, %s11, %s9
  $region1: #{gcn_feature_extractor.1} parent=0
    #allocation2 [shape = 'u8[131072]{0}', space=vmem, size = 0x20000, scoped, tag = 'output window, operand 0']
    #allocation3 [shape = 's32[2]{0}', space=sflag, size = 0x8, scoped, tag = 'scoped memory for gcn_feature_extractor.1']
    %13 = vsyncpa [#allocation3], 0
    %s14 = scalar_lea.sflag [#allocation3], 1
    %15 = vsyncpa %s14, 0
    loop: start=0, step=1, limit=4
    $region2: #{gcn_feature_extractor.1} parent=1 // loop_pre_header
      _
    $region3: #{gcn_feature_extractor.1} parent=1 // loop_header
      %s17 = sphi 0, %s21
      %p18 = scmp.ge.s32.totalorder %s17, 4
      %s27 = sphi 0, %s29
      %s30 = sphi 0, %s27
      %s31 = sphi 0, %s30
      %s47 = sphi 0, %s31
      %s53 = sphi 0, %s55
      %s56 = sphi 0, %s53
      %s57 = sphi 0, %s56
      %s73 = sphi 0, %s57
      %s77 = sphi 0, %s77
      %s79 = sphi 0, %s77
      %s80 = sphi 0, %s79
      %s94 = sphi 0, %s80
      %s98 = sphi 0, %s98
      %s100 = sphi 0, %s98
      %s101 = sphi 0, %s100
      %s115 = sphi 0, %s101
      %s119 = sphi 0, %s119
      %s121 = sphi 0, %s119
      %s122 = sphi 0, %s121
      %s136 = sphi 0, %s122
      %s140 = sphi 0, %s140
      %s142 = sphi 0, %s140
      %s143 = sphi 0, %s142
      %s157 = sphi 0, %s143
      %s161 = sphi 0, %s161
      %s163 = sphi 0, %s161
      %s164 = sphi 0, %s163
      %s178 = sphi 0, %s164
      %s182 = sphi 0, %s182
      %s184 = sphi 0, %s182
      %s185 = sphi 0, %s184
      %s199 = sphi 0, %s185
      %s205 = sphi 0, %s207
      %s208 = sphi 0, %s205
      %s209 = sphi 0, %s208
      %s225 = sphi 0, %s209
    $region4: #{gcn_feature_extractor.1} parent=1 // loop_header_branch
      %20 = sbr.rel (%p18) target = $region8
    $region5: #{gcn_feature_extractor.1} parent=1 // loop_body
      %s22 = ssub.s32 %s17, 1
      %s23 = ssub.s32 %s17, 2
      %s24 = sadd.s32 %s17, 1
      %s25 = ssub.s32 %s17, %s24
      %p26 = scmp.eq.s32.totalorder %s25, 0
      %s28 = sadd.s32 %s27, 1
      %s29 = scalar_select %p26, %s27, %s28
      %p32 = pneg %p26
      %p33 = scmp.eq.s32.totalorder %s17, 1
      %p34 = por %p32, %p33
      %p35 = scmp.ne.s32.totalorder %s27, %s30
      %p36 = scmp.eq.s32.totalorder %s17, 0
      %p37 = por %p35, %p36
      %p38 = scmp.ne.s32.totalorder %s27, %s30
      %p39 = scmp.eq.s32.totalorder %s22, 1
      %p40 = por %p38, %p39
      %p41 = scmp.ne.s32.totalorder %s30, %s31
      %p42 = scmp.eq.s32.totalorder %s22, 0
      %p43 = por %p41, %p42
      %p44 = scmp.ne.s32.totalorder %s30, %s31
      %p45 = scmp.eq.s32.totalorder %s23, 1
      %p46 = por %p44, %p45
      %p48 = scmp.ne.s32.totalorder %s31, %s47
      %p49 = scmp.eq.s32.totalorder %s23, 0
      %p50 = por %p48, %p49
      %s51 = ssub.s32 %s17, %s24
      %p52 = scmp.eq.s32.totalorder %s51, 0
      %s54 = sadd.s32 %s53, 1
      %s55 = scalar_select %p52, %s53, %s54
      %p58 = pneg %p52
      %p59 = scmp.eq.s32.totalorder %s17, 1
      %p60 = por %p58, %p59
      %p61 = scmp.ne.s32.totalorder %s53, %s56
      %p62 = scmp.eq.s32.totalorder %s17, 0
      %p63 = por %p61, %p62
      %p64 = scmp.ne.s32.totalorder %s53, %s56
      %p65 = scmp.eq.s32.totalorder %s22, 1
      %p66 = por %p64, %p65
      %p67 = scmp.ne.s32.totalorder %s56, %s57
      %p68 = scmp.eq.s32.totalorder %s22, 0
      %p69 = por %p67, %p68
      %p70 = scmp.ne.s32.totalorder %s56, %s57
      %p71 = scmp.eq.s32.totalorder %s23, 1
      %p72 = por %p70, %p71
      %p74 = scmp.ne.s32.totalorder %s57, %s73
      %p75 = scmp.eq.s32.totalorder %s23, 0
      %p76 = por %p74, %p75
      %s78 = sadd.s32 %s77, 1
      %p81 = scmp.eq.s32.totalorder %s17, 1
      %p82 = scmp.ne.s32.totalorder %s77, %s79
      %p83 = scmp.eq.s32.totalorder %s17, 0
      %p84 = por %p82, %p83
      %p85 = scmp.ne.s32.totalorder %s77, %s79
      %p86 = scmp.eq.s32.totalorder %s22, 1
      %p87 = por %p85, %p86
      %p88 = scmp.ne.s32.totalorder %s79, %s80
      %p89 = scmp.eq.s32.totalorder %s22, 0
      %p90 = por %p88, %p89
      %p91 = scmp.ne.s32.totalorder %s79, %s80
      %p92 = scmp.eq.s32.totalorder %s23, 1
      %p93 = por %p91, %p92
      %p95 = scmp.ne.s32.totalorder %s80, %s94
      %p96 = scmp.eq.s32.totalorder %s23, 0
      %p97 = por %p95, %p96
      %s99 = sadd.s32 %s98, 1
      %p102 = scmp.eq.s32.totalorder %s17, 1
      %p103 = scmp.ne.s32.totalorder %s98, %s100
      %p104 = scmp.eq.s32.totalorder %s17, 0
      %p105 = por %p103, %p104
      %p106 = scmp.ne.s32.totalorder %s98, %s100
      %p107 = scmp.eq.s32.totalorder %s22, 1
      %p108 = por %p106, %p107
      %p109 = scmp.ne.s32.totalorder %s100, %s101
      %p110 = scmp.eq.s32.totalorder %s22, 0
      %p111 = por %p109, %p110
      %p112 = scmp.ne.s32.totalorder %s100, %s101
      %p113 = scmp.eq.s32.totalorder %s23, 1
      %p114 = por %p112, %p113
      %p116 = scmp.ne.s32.totalorder %s101, %s115
      %p117 = scmp.eq.s32.totalorder %s23, 0
      %p118 = por %p116, %p117
      %s120 = sadd.s32 %s119, 1
      %p123 = scmp.eq.s32.totalorder %s17, 1
      %p124 = scmp.ne.s32.totalorder %s119, %s121
      %p125 = scmp.eq.s32.totalorder %s17, 0
      %p126 = por %p124, %p125
      %p127 = scmp.ne.s32.totalorder %s119, %s121
      %p128 = scmp.eq.s32.totalorder %s22, 1
      %p129 = por %p127, %p128
      %p130 = scmp.ne.s32.totalorder %s121, %s122
      %p131 = scmp.eq.s32.totalorder %s22, 0
      %p132 = por %p130, %p131
      %p133 = scmp.ne.s32.totalorder %s121, %s122
      %p134 = scmp.eq.s32.totalorder %s23, 1
      %p135 = por %p133, %p134
      %p137 = scmp.ne.s32.totalorder %s122, %s136
      %p138 = scmp.eq.s32.totalorder %s23, 0
      %p139 = por %p137, %p138
      %s141 = sadd.s32 %s140, 1
      %p144 = scmp.eq.s32.totalorder %s17, 1
      %p145 = scmp.ne.s32.totalorder %s140, %s142
      %p146 = scmp.eq.s32.totalorder %s17, 0
      %p147 = por %p145, %p146
      %p148 = scmp.ne.s32.totalorder %s140, %s142
      %p149 = scmp.eq.s32.totalorder %s22, 1
      %p150 = por %p148, %p149
      %p151 = scmp.ne.s32.totalorder %s142, %s143
      %p152 = scmp.eq.s32.totalorder %s22, 0
      %p153 = por %p151, %p152
      %p154 = scmp.ne.s32.totalorder %s142, %s143
      %p155 = scmp.eq.s32.totalorder %s23, 1
      %p156 = por %p154, %p155
      %p158 = scmp.ne.s32.totalorder %s143, %s157
      %p159 = scmp.eq.s32.totalorder %s23, 0
      %p160 = por %p158, %p159
      %s162 = sadd.s32 %s161, 1
      %p165 = scmp.eq.s32.totalorder %s17, 1
      %p166 = scmp.ne.s32.totalorder %s161, %s163
      %p167 = scmp.eq.s32.totalorder %s17, 0
      %p168 = por %p166, %p167
      %p169 = scmp.ne.s32.totalorder %s161, %s163
      %p170 = scmp.eq.s32.totalorder %s22, 1
      %p171 = por %p169, %p170
      %p172 = scmp.ne.s32.totalorder %s163, %s164
      %p173 = scmp.eq.s32.totalorder %s22, 0
      %p174 = por %p172, %p173
      %p175 = scmp.ne.s32.totalorder %s163, %s164
      %p176 = scmp.eq.s32.totalorder %s23, 1
      %p177 = por %p175, %p176
      %p179 = scmp.ne.s32.totalorder %s164, %s178
      %p180 = scmp.eq.s32.totalorder %s23, 0
      %p181 = por %p179, %p180
      %s183 = sadd.s32 %s182, 1
      %p186 = scmp.eq.s32.totalorder %s17, 1
      %p187 = scmp.ne.s32.totalorder %s182, %s184
      %p188 = scmp.eq.s32.totalorder %s17, 0
      %p189 = por %p187, %p188
      %p190 = scmp.ne.s32.totalorder %s182, %s184
      %p191 = scmp.eq.s32.totalorder %s22, 1
      %p192 = por %p190, %p191
      %p193 = scmp.ne.s32.totalorder %s184, %s185
      %p194 = scmp.eq.s32.totalorder %s22, 0
      %p195 = por %p193, %p194
      %p196 = scmp.ne.s32.totalorder %s184, %s185
      %p197 = scmp.eq.s32.totalorder %s23, 1
      %p198 = por %p196, %p197
      %p200 = scmp.ne.s32.totalorder %s185, %s199
      %p201 = scmp.eq.s32.totalorder %s23, 0
      %p202 = por %p200, %p201
      %s203 = ssub.s32 %s17, %s24
      %p204 = scmp.eq.s32.totalorder %s203, 0
      %s206 = sadd.s32 %s205, 1
      %s207 = scalar_select %p204, %s205, %s206
      %p210 = pneg %p204
      %p211 = scmp.eq.s32.totalorder %s17, 1
      %p212 = por %p210, %p211
      %p213 = scmp.ne.s32.totalorder %s205, %s208
      %p214 = scmp.eq.s32.totalorder %s17, 0
      %p215 = por %p213, %p214
      %p216 = scmp.ne.s32.totalorder %s205, %s208
      %p217 = scmp.eq.s32.totalorder %s22, 1
      %p218 = por %p216, %p217
      %p219 = scmp.ne.s32.totalorder %s208, %s209
      %p220 = scmp.eq.s32.totalorder %s22, 0
      %p221 = por %p219, %p220
      %p222 = scmp.ne.s32.totalorder %s208, %s209
      %p223 = scmp.eq.s32.totalorder %s23, 1
      %p224 = por %p222, %p223
      %p226 = scmp.ne.s32.totalorder %s209, %s225
      %p227 = scmp.eq.s32.totalorder %s23, 0
      %p228 = por %p226, %p227
      %p229 = scmp.le.s32.totalorder 1, %s17
      %p230 = scmp.lt.s32.totalorder %s17, 3
      %p231 = pnand %p229, %p230
      %p232 = pneg %p231
      // Predicated region
      $region9: #{gcn_feature_extractor.1} parent=5 // pred_check
        _
      $region10: #{gcn_feature_extractor.1} parent=5 // pred_check_branch
        %234 = sbr.rel (%p231) target = $region12
      $region11: #{gcn_feature_extractor.1} parent=5 // pred_region
        %s235 = ssub.s32 %s17, 1
        // Predicated region
        $region13: #{gcn_feature_extractor.1} parent=11 // pred_check
          %p236 = pneg %p90
        $region14: #{gcn_feature_extractor.1} parent=11 // pred_check_branch
          %238 = sbr.rel (%p236) target = $region16
        $region15: #{gcn_feature_extractor.1} parent=11 // pred_region
          _
        $region16: #{gcn_feature_extractor.1} parent=11 // pred_fallthru
          _
        // Predicated region
        $region17: #{gcn_feature_extractor.1} parent=11 // pred_check
          %p239 = pneg %p111
        $region18: #{gcn_feature_extractor.1} parent=11 // pred_check_branch
          %241 = sbr.rel (%p239) target = $region20
        $region19: #{gcn_feature_extractor.1} parent=11 // pred_region
          _
        $region20: #{gcn_feature_extractor.1} parent=11 // pred_fallthru
          _
        // Predicated region
        $region21: #{gcn_feature_extractor.1} parent=11 // pred_check
          %p242 = pneg %p132
        $region22: #{gcn_feature_extractor.1} parent=11 // pred_check_branch
          %244 = sbr.rel (%p242) target = $region24
        $region23: #{gcn_feature_extractor.1} parent=11 // pred_region
          _
        $region24: #{gcn_feature_extractor.1} parent=11 // pred_fallthru
          _
        // Predicated region
        $region25: #{gcn_feature_extractor.1} parent=11 // pred_check
          %p245 = pneg %p153
        $region26: #{gcn_feature_extractor.1} parent=11 // pred_check_branch
          %247 = sbr.rel (%p245) target = $region28
        $region27: #{gcn_feature_extractor.1} parent=11 // pred_region
          _
        $region28: #{gcn_feature_extractor.1} parent=11 // pred_fallthru
          _
        // Predicated region
        $region29: #{gcn_feature_extractor.1} parent=11 // pred_check
          %p248 = pneg %p174
        $region30: #{gcn_feature_extractor.1} parent=11 // pred_check_branch
          %250 = sbr.rel (%p248) target = $region32
        $region31: #{gcn_feature_extractor.1} parent=11 // pred_region
          _
        $region32: #{gcn_feature_extractor.1} parent=11 // pred_fallthru
          _
        // Predicated region
        $region33: #{gcn_feature_extractor.1} parent=11 // pred_check
          %p251 = pneg %p195
        $region34: #{gcn_feature_extractor.1} parent=11 // pred_check_branch
          %253 = sbr.rel (%p251) target = $region36
        $region35: #{gcn_feature_extractor.1} parent=11 // pred_region
          _
        $region36: #{gcn_feature_extractor.1} parent=11 // pred_fallthru
          _
      $region12: #{gcn_feature_extractor.1} parent=5 // pred_fallthru
        _
      %p254 = scmp.lt.s32.totalorder %s17, 2
      // Predicated region
      $region37: #{gcn_feature_extractor.1} parent=5 // pred_check
        %p255 = pneg %p254
      $region38: #{gcn_feature_extractor.1} parent=5 // pred_check_branch
        %257 = sbr.rel (%p255) target = $region40
      $region39: #{gcn_feature_extractor.1} parent=5 // pred_region
        // Predicated region
        $region41: #{gcn_feature_extractor.1} parent=39 // pred_check
          %p258 = pneg %p37
        $region42: #{gcn_feature_extractor.1} parent=39 // pred_check_branch
          %260 = sbr.rel (%p258) target = $region44
        $region43: #{gcn_feature_extractor.1} parent=39 // pred_region
          %p261 = scmp.lt.s32.totalorder %s17, 1
          %s262 = scalar_select %p261, %s17, 1
          %s263 = smul.addr %s262, 2
          %s264 = smul.addr %s263, 4
          %s265 = scalar_lea.vmem %s0, %s264
        $region44: #{gcn_feature_extractor.1} parent=39 // pred_fallthru
          _
        // Predicated region
        $region45: #{gcn_feature_extractor.1} parent=39 // pred_check
          %p266 = pneg %p63
        $region46: #{gcn_feature_extractor.1} parent=39 // pred_check_branch
          %268 = sbr.rel (%p266) target = $region48
        $region47: #{gcn_feature_extractor.1} parent=39 // pred_region
          %p269 = scmp.lt.s32.totalorder %s17, 1
          %s270 = scalar_select %p269, %s17, 1
          %s271 = smul.addr %s270, 2
          %s272 = smul.addr %s271, 4
          %s273 = scalar_lea.vmem %s1, %s272
        $region48: #{gcn_feature_extractor.1} parent=39 // pred_fallthru
          _
      $region40: #{gcn_feature_extractor.1} parent=5 // pred_fallthru
        _
      %p274 = scmp.le.s32.totalorder 1, %s17
      %p275 = scmp.lt.s32.totalorder %s17, 3
      %p276 = pnand %p274, %p275
      %p277 = pneg %p276
      // Predicated region
      $region49: #{gcn_feature_extractor.1} parent=5 // pred_check
        _
      $region50: #{gcn_feature_extractor.1} parent=5 // pred_check_branch
        %279 = sbr.rel (%p276) target = $region52
      $region51: #{gcn_feature_extractor.1} parent=5 // pred_region
        %s280 = ssub.s32 %s17, 1
        %p281 = scmp.lt.s32.totalorder %s22, 1
        %s282 = scalar_select %p281, %s22, 1
        %s283 = smul.addr %s282, 2
        %s284 = smul.addr %s283, 4
        %s285 = scalar_lea.vmem %s0, %s284
        %p286 = pneg %p43
        %p287 = pneg %p40
        %p288 = scmp.lt.s32.totalorder %s22, 1
        %s289 = scalar_select %p288, %s22, 1
        %s290 = smul.addr %s289, 2
        %s291 = smul.addr %s290, 4
        %s292 = scalar_lea.vmem %s1, %s291
        %p293 = pneg %p69
        %p294 = pneg %p66
        %p295 = pneg %p90
        %p296 = pneg %p87
        %p297 = pneg %p111
        %p298 = pneg %p108
        %p299 = pneg %p132
        %p300 = pneg %p129
        %p301 = pneg %p153
        %p302 = pneg %p150
        %p303 = pneg %p174
        %p304 = pneg %p171
        %p305 = pneg %p195
        %p306 = pneg %p192
        %p307 = pneg %p221
        %p308 = pneg %p218
        %s309 = sand.u32 %s208, 1
        %s310 = scalar_lea.sflag [#allocation3], %s309
        %s311 = sand.u32 %s208, 1
        %s312 = smul.addr %s311, 128
        %s313 = scalar_lea.vmem [#allocation2], %s312
        %p314 = scmp.lt.s32.totalorder %s22, 1
        %s315 = scalar_select %p314, %s22, 1
        %s316 = smul.addr %s315, 2
        %s317 = smul.addr %s316, 4
        %s318 = scalar_lea.vmem %s0, %s317
        %p319 = scmp.lt.s32.totalorder %s22, 1
        %s320 = scalar_select %p319, %s22, 1
        %s321 = smul.addr %s320, 2
        %s322 = smul.addr %s321, 4
        %s323 = scalar_lea.vmem %s1, %s322
        %v325 = vld [vmem:[%s318] sm:$0xf]
        %v326 = vld [vmem:[%s318 + $0x4] sm:$0xf]
        %v327 = vld [vmem:[%s323] sm:$0xf]
        %v328 = vld [vmem:[%s323 + $0x4] sm:$0xf]
        %v331 = vunpack.c.l.b16 %v325
        %v332 = vunpack.c.l.b16 %v326
        %v333 = vpack.c.b16 %v332, %v331
        %v336 = vunpack.c.l.b16 %v327
        %v337 = vunpack.c.l.b16 %v328
        %v338 = vpack.c.b16 %v337, %v336
        %vm340 = vcmask 130048
        %v342 = vsel %vm340, %v333, 0
        %344 = vmatprep.subr.bf16.mxu0 0
        %345 = vmatpush1.bf16.msra.mxu0 0
        %346 = vmatprep.subr.bf16.mxu0 0
        %347 = vmatpush1.bf16.msra.mxu0 0
        %348 = vmatprep.subr.bf16.mxu0 0
        %349 = vmatpush1.bf16.msra.mxu0 0
        %350 = vmatprep.subr.bf16.mxu0 0
        %351 = vmatpush1.bf16.msra.mxu0 0
        %352 = vmatprep.subr.bf16.mxu0 0
        %353 = vmatpush1.bf16.msra.mxu0 0
        %354 = vmatprep.subr.bf16.mxu0 0
        %355 = vmatpush1.bf16.msra.mxu0 0
        %356 = vmatprep.subr.bf16.mxu0 0
        %357 = vmatpush1.bf16.msra.mxu0 0
        %358 = vmatprep.subr.bf16.mxu0 0
        %359 = vmatpush1.bf16.msra.mxu0 %v338
        %360 = vmatprep.subr.bf16.mxu0 0
        %361 = vmatpush2.bf16.msra.mxu0 0
        %362 = vmatprep.subr.bf16.mxu0 0
        %363 = vmatpush2.bf16.msra.mxu0 0
        %364 = vmatprep.subr.bf16.mxu0 0
        %365 = vmatpush2.bf16.msra.mxu0 0
        %366 = vmatprep.subr.bf16.mxu0 0
        %367 = vmatpush2.bf16.msra.mxu0 0
        %368 = vmatprep.subr.bf16.mxu0 0
        %369 = vmatpush2.bf16.msra.mxu0 0
        %370 = vmatprep.subr.bf16.mxu0 0
        %371 = vmatpush2.bf16.msra.mxu0 0
        %372 = vmatprep.subr.bf16.mxu0 0
        %373 = vmatpush2.bf16.msra.mxu0 0
        %374 = vmatprep.subr.bf16.mxu0 0
        %375 = vmatpush2.bf16.msra.mxu0 0
        %376 = vmatprep.mubr.bf16.mxu0 0
        %377 = vmatmul.mubr.bf16.gmra.mxu0 %v342
        %v378 = vpop.f32.mrf.mxu0
        %v379 = vadd.f32 0.0, %v378
        %v380 = vpop.f32.mrf.mxu0
        %v381 = vpop.f32.mrf.mxu0
        %v382 = vadd.f32 0.0, %v381
        %v383 = vpop.f32.mrf.mxu0
        %384 = vdwg.mxu0
        %v385 = vpack.c.bf16 %v382, %v379
        %v386 = vld [vmem:[%s2] sm:$0x1]
        %v387 = vld [vmem:[%s5] sm:$0x1]
        %v389 = vlaneseq
        %v390 = vshrl.u32 %v389, 7
        %v391 = vsub.s32 0, %v390
        %v392 = vrot.slane %v387, %v391
        %vm394 = vcmask 15360
        %v396 = vsel %vm394, %v385, 0
        %vm398 = vcmask 1040384
        %v400 = vsel %vm398, %v386, 0
        %402 = vmatprep.subr.bf16.mxu0 0
        %403 = vmatpush1.bf16.msra.mxu0 0
        %404 = vmatprep.subr.bf16.mxu0 0
        %405 = vmatpush1.bf16.msra.mxu0 0
        %406 = vmatprep.subr.bf16.mxu0 0
        %407 = vmatpush1.bf16.msra.mxu0 0
        %408 = vmatprep.subr.bf16.mxu0 0
        %409 = vmatpush1.bf16.msra.mxu0 0
        %410 = vmatprep.subr.bf16.mxu0 0
        %411 = vmatpush1.bf16.msra.mxu0 0
        %412 = vmatprep.subr.bf16.mxu0 0
        %413 = vmatpush1.bf16.msra.mxu0 0
        %414 = vmatprep.subr.bf16.mxu0 0
        %415 = vmatpush1.bf16.msra.mxu0 0
        %416 = vmatprep.subr.bf16.mxu0 0
        %417 = vmatpush1.bf16.msra.mxu0 %v400
        %418 = vmatprep.subr.bf16.mxu0 0
        %419 = vmatpush2.bf16.msra.mxu0 0
        %420 = vmatprep.subr.bf16.mxu0 0
        %421 = vmatpush2.bf16.msra.mxu0 0
        %422 = vmatprep.subr.bf16.mxu0 0
        %423 = vmatpush2.bf16.msra.mxu0 0
        %424 = vmatprep.subr.bf16.mxu0 0
        %425 = vmatpush2.bf16.msra.mxu0 0
        %426 = vmatprep.subr.bf16.mxu0 0
        %427 = vmatpush2.bf16.msra.mxu0 0
        %428 = vmatprep.subr.bf16.mxu0 0
        %429 = vmatpush2.bf16.msra.mxu0 0
        %430 = vmatprep.subr.bf16.mxu0 0
        %431 = vmatpush2.bf16.msra.mxu0 0
        %432 = vmatprep.subr.bf16.mxu0 0
        %433 = vmatpush2.bf16.msra.mxu0 0
        %434 = vmatprep.mubr.bf16.mxu0 0
        %435 = vmatmul.mubr.bf16.gmra.mxu0 %v396
        %v436 = vpop.f32.mrf.mxu0
        %v437 = vadd.f32 %v392, %v436
        %v438 = vpop.f32.mrf.mxu0
        %v439 = vpop.f32.mrf.mxu0
        %v440 = vadd.f32 %v392, %v439
        %v441 = vpop.f32.mrf.mxu0
        %442 = vdwg.mxu0
        %vm443 = vcmp.ge.f32.partialorder %v437, 0.0
        %vm444 = vcmp.ge.f32.partialorder %v440, 0.0
        %v445 = vmul.f32 %v437, 0.2
        %v446 = vmul.f32 %v440, 0.2
        %v447 = vsel %vm443, %v437, %v445
        %v448 = vsel %vm444, %v440, %v446
        %v449 = vpack.c.bf16 %v448, %v447
        %450 = vmatprep.subr.bf16.mxu0 0
        %451 = vmatpush1.bf16.msra.mxu0 0
        %452 = vmatprep.subr.bf16.mxu0 0
        %453 = vmatpush1.bf16.msra.mxu0 0
        %454 = vmatprep.subr.bf16.mxu0 0
        %455 = vmatpush1.bf16.msra.mxu0 0
        %456 = vmatprep.subr.bf16.mxu0 0
        %457 = vmatpush1.bf16.msra.mxu0 0
        %458 = vmatprep.subr.bf16.mxu0 0
        %459 = vmatpush1.bf16.msra.mxu0 0
        %460 = vmatprep.subr.bf16.mxu0 0
        %461 = vmatpush1.bf16.msra.mxu0 0
        %462 = vmatprep.subr.bf16.mxu0 0
        %463 = vmatpush1.bf16.msra.mxu0 0
        %464 = vmatprep.subr.bf16.mxu0 0
        %465 = vmatpush1.bf16.msra.mxu0 %v449
        %466 = vmatprep.subr.bf16.mxu0 0
        %467 = vmatpush2.bf16.msra.mxu0 0
        %468 = vmatprep.subr.bf16.mxu0 0
        %469 = vmatpush2.bf16.msra.mxu0 0
        %470 = vmatprep.subr.bf16.mxu0 0
        %471 = vmatpush2.bf16.msra.mxu0 0
        %472 = vmatprep.subr.bf16.mxu0 0
        %473 = vmatpush2.bf16.msra.mxu0 0
        %474 = vmatprep.subr.bf16.mxu0 0
        %475 = vmatpush2.bf16.msra.mxu0 0
        %476 = vmatprep.subr.bf16.mxu0 0
        %477 = vmatpush2.bf16.msra.mxu0 0
        %478 = vmatprep.subr.bf16.mxu0 0
        %479 = vmatpush2.bf16.msra.mxu0 0
        %480 = vmatprep.subr.bf16.mxu0 0
        %481 = vmatpush2.bf16.msra.mxu0 0
        %482 = vmatprep.mubr.bf16.mxu0 0
        %483 = vmatmul.mubr.bf16.gmra.mxu0 %v342
        %v484 = vpop.f32.mrf.mxu0
        %v485 = vadd.f32 0.0, %v484
        %v486 = vpop.f32.mrf.mxu0
        %v487 = vpop.f32.mrf.mxu0
        %v488 = vadd.f32 0.0, %v487
        %v489 = vpop.f32.mrf.mxu0
        %490 = vdwg.mxu0
        %v491 = vpack.c.bf16 %v488, %v485
        %v492 = vld [vmem:[%s3] sm:$0xf]
        %v493 = vld [vmem:[%s3 + $0x4] sm:$0xf]
        %v494 = vld [vmem:[%s3 + $0x8] sm:$0xf]
        %v495 = vld [vmem:[%s3 + $0xc] sm:$0xf]
        %v496 = vld [vmem:[%s3 + $0x10] sm:$0xf]
        %v497 = vld [vmem:[%s3 + $0x14] sm:$0xf]
        %v498 = vld [vmem:[%s3 + $0x18] sm:$0xf]
        %v499 = vld [vmem:[%s3 + $0x1c] sm:$0xf]
        %v500 = vld [vmem:[%s6] sm:$0x1]
        %v502 = vlaneseq
        %v503 = vshrl.u32 %v502, 7
        %v504 = vsub.s32 0, %v503
        %v505 = vrot.slane %v500, %v504
        %v515 = vunpack.c.l.b16 %v492
        %v516 = vunpack.c.l.b16 %v493
        %v517 = vunpack.c.l.b16 %v494
        %v518 = vunpack.c.l.b16 %v495
        %v519 = vunpack.c.l.b16 %v496
        %v520 = vunpack.c.l.b16 %v497
        %v521 = vunpack.c.l.b16 %v498
        %v522 = vunpack.c.l.b16 %v499
        %v523 = vpack.c.b16 %v516, %v515
        %v524 = vpack.c.b16 %v518, %v517
        %v525 = vpack.c.b16 %v520, %v519
        %v526 = vpack.c.b16 %v522, %v521
        %vm531 = vcmask 523264
        %v533 = vsel %vm531, %v491, 0
        %535 = vmatprep.subr.bf16.mxu0 0
        %536 = vmatpush1.bf16.msra.mxu0 0
        %537 = vmatprep.subr.bf16.mxu0 0
        %538 = vmatpush1.bf16.msra.mxu0 0
        %539 = vmatprep.subr.bf16.mxu0 0
        %540 = vmatpush1.bf16.msra.mxu0 0
        %541 = vmatprep.subr.bf16.mxu0 0
        %542 = vmatpush1.bf16.msra.mxu0 0
        %543 = vmatprep.subr.bf16.mxu0 0
        %544 = vmatpush1.bf16.msra.mxu0 %v526
        %545 = vmatprep.subr.bf16.mxu0 0
        %546 = vmatpush1.bf16.msra.mxu0 %v525
        %547 = vmatprep.subr.bf16.mxu0 0
        %548 = vmatpush1.bf16.msra.mxu0 %v524
        %549 = vmatprep.subr.bf16.mxu0 0
        %550 = vmatpush1.bf16.msra.mxu0 %v523
        %551 = vmatprep.subr.bf16.mxu0 0
        %552 = vmatpush2.bf16.msra.mxu0 0
        %553 = vmatprep.subr.bf16.mxu0 0
        %554 = vmatpush2.bf16.msra.mxu0 0
        %555 = vmatprep.subr.bf16.mxu0 0
        %556 = vmatpush2.bf16.msra.mxu0 0
        %557 = vmatprep.subr.bf16.mxu0 0
        %558 = vmatpush2.bf16.msra.mxu0 0
        %559 = vmatprep.subr.bf16.mxu0 0
        %560 = vmatpush2.bf16.msra.mxu0 0
        %561 = vmatprep.subr.bf16.mxu0 0
        %562 = vmatpush2.bf16.msra.mxu0 0
        %563 = vmatprep.subr.bf16.mxu0 0
        %564 = vmatpush2.bf16.msra.mxu0 0
        %565 = vmatprep.subr.bf16.mxu0 0
        %566 = vmatpush2.bf16.msra.mxu0 0
        %567 = vmatprep.mubr.bf16.mxu0 0
        %568 = vmatmul.mubr.bf16.gmra.mxu0 %v533
        %v569 = vpop.f32.mrf.mxu0
        %v570 = vadd.f32 %v505, %v569
        %v571 = vpop.f32.mrf.mxu0
        %v572 = vpop.f32.mrf.mxu0
        %v573 = vadd.f32 %v505, %v572
        %v574 = vpop.f32.mrf.mxu0
        %575 = vdwg.mxu0
        %vm576 = vcmp.ge.f32.partialorder %v570, 0.0
        %vm577 = vcmp.ge.f32.partialorder %v573, 0.0
        %v578 = vmul.f32 %v570, 0.2
        %v579 = vmul.f32 %v573, 0.2
        %v580 = vsel %vm576, %v570, %v578
        %v581 = vsel %vm577, %v573, %v579
        %v582 = vpack.c.bf16 %v581, %v580
        %583 = vmatprep.subr.bf16.mxu0 0
        %584 = vmatpush1.bf16.msra.mxu0 0
        %585 = vmatprep.subr.bf16.mxu0 0
        %586 = vmatpush1.bf16.msra.mxu0 0
        %587 = vmatprep.subr.bf16.mxu0 0
        %588 = vmatpush1.bf16.msra.mxu0 0
        %589 = vmatprep.subr.bf16.mxu0 0
        %590 = vmatpush1.bf16.msra.mxu0 0
        %591 = vmatprep.subr.bf16.mxu0 0
        %592 = vmatpush1.bf16.msra.mxu0 0
        %593 = vmatprep.subr.bf16.mxu0 0
        %594 = vmatpush1.bf16.msra.mxu0 0
        %595 = vmatprep.subr.bf16.mxu0 0
        %596 = vmatpush1.bf16.msra.mxu0 0
        %597 = vmatprep.subr.bf16.mxu0 0
        %598 = vmatpush1.bf16.msra.mxu0 %v582
        %599 = vmatprep.subr.bf16.mxu0 0
        %600 = vmatpush2.bf16.msra.mxu0 0
        %601 = vmatprep.subr.bf16.mxu0 0
        %602 = vmatpush2.bf16.msra.mxu0 0
        %603 = vmatprep.subr.bf16.mxu0 0
        %604 = vmatpush2.bf16.msra.mxu0 0
        %605 = vmatprep.subr.bf16.mxu0 0
        %606 = vmatpush2.bf16.msra.mxu0 0
        %607 = vmatprep.subr.bf16.mxu0 0
        %608 = vmatpush2.bf16.msra.mxu0 0
        %609 = vmatprep.subr.bf16.mxu0 0
        %610 = vmatpush2.bf16.msra.mxu0 0
        %611 = vmatprep.subr.bf16.mxu0 0
        %612 = vmatpush2.bf16.msra.mxu0 0
        %613 = vmatprep.subr.bf16.mxu0 0
        %614 = vmatpush2.bf16.msra.mxu0 0
        %615 = vmatprep.mubr.bf16.mxu0 0
        %616 = vmatmul.mubr.bf16.gmra.mxu0 %v342
        %v617 = vpop.f32.mrf.mxu0
        %v618 = vadd.f32 0.0, %v617
        %v619 = vpop.f32.mrf.mxu0
        %v620 = vpop.f32.mrf.mxu0
        %v621 = vadd.f32 0.0, %v620
        %v622 = vpop.f32.mrf.mxu0
        %623 = vdwg.mxu0
        %v624 = vpack.c.bf16 %v621, %v618
        %v625 = vld [vmem:[%s4] sm:$0xff]
        %v626 = vld [vmem:[%s4 + $0x8] sm:$0xff]
        %v627 = vld [vmem:[%s4 + $0x10] sm:$0xff]
        %v628 = vld [vmem:[%s4 + $0x18] sm:$0xff]
        %v629 = vld [vmem:[%s4 + $0x20] sm:$0xff]
        %v630 = vld [vmem:[%s4 + $0x28] sm:$0xff]
        %v631 = vld [vmem:[%s4 + $0x30] sm:$0xff]
        %v632 = vld [vmem:[%s4 + $0x38] sm:$0xff]
        %v633 = vld [vmem:[%s4 + $0x40] sm:$0xff]
        %v634 = vld [vmem:[%s4 + $0x48] sm:$0xff]
        %v635 = vld [vmem:[%s4 + $0x50] sm:$0xff]
        %v636 = vld [vmem:[%s4 + $0x58] sm:$0xff]
        %v637 = vld [vmem:[%s4 + $0x60] sm:$0xff]
        %v638 = vld [vmem:[%s4 + $0x68] sm:$0xff]
        %v639 = vld [vmem:[%s4 + $0x70] sm:$0xff]
        %v640 = vld [vmem:[%s4 + $0x78] sm:$0xff]
        %v641 = vld [vmem:[%s4 + $0x80] sm:$0xff]
        %v642 = vld [vmem:[%s4 + $0x88] sm:$0xff]
        %v643 = vld [vmem:[%s4 + $0x90] sm:$0xff]
        %v644 = vld [vmem:[%s4 + $0x98] sm:$0xff]
        %v645 = vld [vmem:[%s4 + $0xa0] sm:$0xff]
        %v646 = vld [vmem:[%s4 + $0xa8] sm:$0xff]
        %v647 = vld [vmem:[%s4 + $0xb0] sm:$0xff]
        %v648 = vld [vmem:[%s4 + $0xb8] sm:$0xff]
        %v649 = vld [vmem:[%s4 + $0xc0] sm:$0xff]
        %v650 = vld [vmem:[%s4 + $0xc8] sm:$0xff]
        %v651 = vld [vmem:[%s4 + $0xd0] sm:$0xff]
        %v652 = vld [vmem:[%s4 + $0xd8] sm:$0xff]
        %v653 = vld [vmem:[%s4 + $0xe0] sm:$0xff]
        %v654 = vld [vmem:[%s4 + $0xe8] sm:$0xff]
        %v655 = vld [vmem:[%s4 + $0xf0] sm:$0xff]
        %v656 = vld [vmem:[%s4 + $0xf8] sm:$0xff]
        %v657 = vld [vmem:[%s4 + $0x100] sm:$0xff]
        %v658 = vld [vmem:[%s4 + $0x108] sm:$0xff]
        %v659 = vld [vmem:[%s4 + $0x110] sm:$0xff]
        %v660 = vld [vmem:[%s4 + $0x118] sm:$0xff]
        %v661 = vld [vmem:[%s4 + $0x120] sm:$0xff]
        %v662 = vld [vmem:[%s4 + $0x128] sm:$0xff]
        %v663 = vld [vmem:[%s4 + $0x130] sm:$0xff]
        %v664 = vld [vmem:[%s4 + $0x138] sm:$0xff]
        %v665 = vld [vmem:[%s4 + $0x140] sm:$0xff]
        %v666 = vld [vmem:[%s4 + $0x148] sm:$0xff]
        %v667 = vld [vmem:[%s4 + $0x150] sm:$0xff]
        %v668 = vld [vmem:[%s4 + $0x158] sm:$0xff]
        %v669 = vld [vmem:[%s4 + $0x160] sm:$0xff]
        %v670 = vld [vmem:[%s4 + $0x168] sm:$0xff]
        %v671 = vld [vmem:[%s4 + $0x170] sm:$0xff]
        %v672 = vld [vmem:[%s4 + $0x178] sm:$0xff]
        %v673 = vld [vmem:[%s4 + $0x180] sm:$0xff]
        %v674 = vld [vmem:[%s4 + $0x188] sm:$0xff]
        %v675 = vld [vmem:[%s4 + $0x190] sm:$0xff]
        %v676 = vld [vmem:[%s4 + $0x198] sm:$0xff]
        %v677 = vld [vmem:[%s4 + $0x1a0] sm:$0xff]
        %v678 = vld [vmem:[%s4 + $0x1a8] sm:$0xff]
        %v679 = vld [vmem:[%s4 + $0x1b0] sm:$0xff]
        %v680 = vld [vmem:[%s4 + $0x1b8] sm:$0xff]
        %v681 = vld [vmem:[%s4 + $0x1c0] sm:$0xff]
        %v682 = vld [vmem:[%s4 + $0x1c8] sm:$0xff]
        %v683 = vld [vmem:[%s4 + $0x1d0] sm:$0xff]
        %v684 = vld [vmem:[%s4 + $0x1d8] sm:$0xff]
        %v685 = vld [vmem:[%s4 + $0x1e0] sm:$0xff]
        %v686 = vld [vmem:[%s4 + $0x1e8] sm:$0xff]
        %v687 = vld [vmem:[%s4 + $0x1f0] sm:$0xff]
        %v688 = vld [vmem:[%s4 + $0x1f8] sm:$0xff]
        %v689 = vld [vmem:[%s7] sm:$0xff]
        %v691 = vlaneseq
        %v692 = vshrl.u32 %v691, 7
        %v693 = vsub.s32 0, %v692
        %v694 = vrot.slane %v689, %v693
        %v695 = vlaneseq
        %v696 = vshrl.u32 %v695, 7
        %v697 = vsub.s32 1, %v696
        %v698 = vrot.slane %v689, %v697
        %v699 = vlaneseq
        %v700 = vshrl.u32 %v699, 7
        %v701 = vsub.s32 2, %v700
        %v702 = vrot.slane %v689, %v701
        %v703 = vlaneseq
        %v704 = vshrl.u32 %v703, 7
        %v705 = vsub.s32 3, %v704
        %v706 = vrot.slane %v689, %v705
        %v707 = vlaneseq
        %v708 = vshrl.u32 %v707, 7
        %v709 = vsub.s32 4, %v708
        %v710 = vrot.slane %v689, %v709
        %v711 = vlaneseq
        %v712 = vshrl.u32 %v711, 7
        %v713 = vsub.s32 5, %v712
        %v714 = vrot.slane %v689, %v713
        %v715 = vlaneseq
        %v716 = vshrl.u32 %v715, 7
        %v717 = vsub.s32 6, %v716
        %v718 = vrot.slane %v689, %v717
        %v719 = vlaneseq
        %v720 = vshrl.u32 %v719, 7
        %v721 = vsub.s32 7, %v720
        %v722 = vrot.slane %v689, %v721
        %v795 = vunpack.c.l.b16 %v625
        %v796 = vunpack.c.h.b16 %v625
        %v797 = vunpack.c.l.b16 %v626
        %v798 = vunpack.c.h.b16 %v626
        %v799 = vunpack.c.l.b16 %v627
        %v800 = vunpack.c.h.b16 %v627
        %v801 = vunpack.c.l.b16 %v628
        %v802 = vunpack.c.h.b16 %v628
        %v803 = vunpack.c.l.b16 %v629
        %v804 = vunpack.c.h.b16 %v629
        %v805 = vunpack.c.l.b16 %v630
        %v806 = vunpack.c.h.b16 %v630
        %v807 = vunpack.c.l.b16 %v631
        %v808 = vunpack.c.h.b16 %v631
        %v809 = vunpack.c.l.b16 %v632
        %v810 = vunpack.c.h.b16 %v632
        %v811 = vunpack.c.l.b16 %v633
        %v812 = vunpack.c.h.b16 %v633
        %v813 = vunpack.c.l.b16 %v634
        %v814 = vunpack.c.h.b16 %v634
        %v815 = vunpack.c.l.b16 %v635
        %v816 = vunpack.c.h.b16 %v635
        %v817 = vunpack.c.l.b16 %v636
        %v818 = vunpack.c.h.b16 %v636
        %v819 = vunpack.c.l.b16 %v637
        %v820 = vunpack.c.h.b16 %v637
        %v821 = vunpack.c.l.b16 %v638
        %v822 = vunpack.c.h.b16 %v638
        %v823 = vunpack.c.l.b16 %v639
        %v824 = vunpack.c.h.b16 %v639
        %v825 = vunpack.c.l.b16 %v640
        %v826 = vunpack.c.h.b16 %v640
        %v827 = vunpack.c.l.b16 %v641
        %v828 = vunpack.c.h.b16 %v641
        %v829 = vunpack.c.l.b16 %v642
        %v830 = vunpack.c.h.b16 %v642
        %v831 = vunpack.c.l.b16 %v643
        %v832 = vunpack.c.h.b16 %v643
        %v833 = vunpack.c.l.b16 %v644
        %v834 = vunpack.c.h.b16 %v644
        %v835 = vunpack.c.l.b16 %v645
        %v836 = vunpack.c.h.b16 %v645
        %v837 = vunpack.c.l.b16 %v646
        %v838 = vunpack.c.h.b16 %v646
        %v839 = vunpack.c.l.b16 %v647
        %v840 = vunpack.c.h.b16 %v647
        %v841 = vunpack.c.l.b16 %v648
        %v842 = vunpack.c.h.b16 %v648
        %v843 = vunpack.c.l.b16 %v649
        %v844 = vunpack.c.h.b16 %v649
        %v845 = vunpack.c.l.b16 %v650
        %v846 = vunpack.c.h.b16 %v650
        %v847 = vunpack.c.l.b16 %v651
        %v848 = vunpack.c.h.b16 %v651
        %v849 = vunpack.c.l.b16 %v652
        %v850 = vunpack.c.h.b16 %v652
        %v851 = vunpack.c.l.b16 %v653
        %v852 = vunpack.c.h.b16 %v653
        %v853 = vunpack.c.l.b16 %v654
        %v854 = vunpack.c.h.b16 %v654
        %v855 = vunpack.c.l.b16 %v655
        %v856 = vunpack.c.h.b16 %v655
        %v857 = vunpack.c.l.b16 %v656
        %v858 = vunpack.c.h.b16 %v656
        %v859 = vunpack.c.l.b16 %v657
        %v860 = vunpack.c.h.b16 %v657
        %v861 = vunpack.c.l.b16 %v658
        %v862 = vunpack.c.h.b16 %v658
        %v863 = vunpack.c.l.b16 %v659
        %v864 = vunpack.c.h.b16 %v659
        %v865 = vunpack.c.l.b16 %v660
        %v866 = vunpack.c.h.b16 %v660
        %v867 = vunpack.c.l.b16 %v661
        %v868 = vunpack.c.h.b16 %v661
        %v869 = vunpack.c.l.b16 %v662
        %v870 = vunpack.c.h.b16 %v662
        %v871 = vunpack.c.l.b16 %v663
        %v872 = vunpack.c.h.b16 %v663
        %v873 = vunpack.c.l.b16 %v664
        %v874 = vunpack.c.h.b16 %v664
        %v875 = vunpack.c.l.b16 %v665
        %v876 = vunpack.c.h.b16 %v665
        %v877 = vunpack.c.l.b16 %v666
        %v878 = vunpack.c.h.b16 %v666
        %v879 = vunpack.c.l.b16 %v667
        %v880 = vunpack.c.h.b16 %v667
        %v881 = vunpack.c.l.b16 %v668
        %v882 = vunpack.c.h.b16 %v668
        %v883 = vunpack.c.l.b16 %v669
        %v884 = vunpack.c.h.b16 %v669
        %v885 = vunpack.c.l.b16 %v670
        %v886 = vunpack.c.h.b16 %v670
        %v887 = vunpack.c.l.b16 %v671
        %v888 = vunpack.c.h.b16 %v671
        %v889 = vunpack.c.l.b16 %v672
        %v890 = vunpack.c.h.b16 %v672
        %v891 = vunpack.c.l.b16 %v673
        %v892 = vunpack.c.h.b16 %v673
        %v893 = vunpack.c.l.b16 %v674
        %v894 = vunpack.c.h.b16 %v674
        %v895 = vunpack.c.l.b16 %v675
        %v896 = vunpack.c.h.b16 %v675
        %v897 = vunpack.c.l.b16 %v676
        %v898 = vunpack.c.h.b16 %v676
        %v899 = vunpack.c.l.b16 %v677
        %v900 = vunpack.c.h.b16 %v677
        %v901 = vunpack.c.l.b16 %v678
        %v902 = vunpack.c.h.b16 %v678
        %v903 = vunpack.c.l.b16 %v679
        %v904 = vunpack.c.h.b16 %v679
        %v905 = vunpack.c.l.b16 %v680
        %v906 = vunpack.c.h.b16 %v680
        %v907 = vunpack.c.l.b16 %v681
        %v908 = vunpack.c.h.b16 %v681
        %v909 = vunpack.c.l.b16 %v682
        %v910 = vunpack.c.h.b16 %v682
        %v911 = vunpack.c.l.b16 %v683
        %v912 = vunpack.c.h.b16 %v683
        %v913 = vunpack.c.l.b16 %v684
        %v914 = vunpack.c.h.b16 %v684
        %v915 = vunpack.c.l.b16 %v685
        %v916 = vunpack.c.h.b16 %v685
        %v917 = vunpack.c.l.b16 %v686
        %v918 = vunpack.c.h.b16 %v686
        %v919 = vunpack.c.l.b16 %v687
        %v920 = vunpack.c.h.b16 %v687
        %v921 = vunpack.c.l.b16 %v688
        %v922 = vunpack.c.h.b16 %v688
        %v923 = vpack.c.b16 %v803, %v795
        %v924 = vpack.c.b16 %v804, %v796
        %v925 = vpack.c.b16 %v805, %v797
        %v926 = vpack.c.b16 %v806, %v798
        %v927 = vpack.c.b16 %v807, %v799
        %v928 = vpack.c.b16 %v808, %v800
        %v929 = vpack.c.b16 %v809, %v801
        %v930 = vpack.c.b16 %v810, %v802
        %v931 = vpack.c.b16 %v819, %v811
        %v932 = vpack.c.b16 %v820, %v812
        %v933 = vpack.c.b16 %v821, %v813
        %v934 = vpack.c.b16 %v822, %v814
        %v935 = vpack.c.b16 %v823, %v815
        %v936 = vpack.c.b16 %v824, %v816
        %v937 = vpack.c.b16 %v825, %v817
        %v938 = vpack.c.b16 %v826, %v818
        %v939 = vpack.c.b16 %v835, %v827
        %v940 = vpack.c.b16 %v836, %v828
        %v941 = vpack.c.b16 %v837, %v829
        %v942 = vpack.c.b16 %v838, %v830
        %v943 = vpack.c.b16 %v839, %v831
        %v944 = vpack.c.b16 %v840, %v832
        %v945 = vpack.c.b16 %v841, %v833
        %v946 = vpack.c.b16 %v842, %v834
        %v947 = vpack.c.b16 %v851, %v843
        %v948 = vpack.c.b16 %v852, %v844
        %v949 = vpack.c.b16 %v853, %v845
        %v950 = vpack.c.b16 %v854, %v846
        %v951 = vpack.c.b16 %v855, %v847
        %v952 = vpack.c.b16 %v856, %v848
        %v953 = vpack.c.b16 %v857, %v849
        %v954 = vpack.c.b16 %v858, %v850
        %v955 = vpack.c.b16 %v867, %v859
        %v956 = vpack.c.b16 %v868, %v860
        %v957 = vpack.c.b16 %v869, %v861
        %v958 = vpack.c.b16 %v870, %v862
        %v959 = vpack.c.b16 %v871, %v863
        %v960 = vpack.c.b16 %v872, %v864
        %v961 = vpack.c.b16 %v873, %v865
        %v962 = vpack.c.b16 %v874, %v866
        %v963 = vpack.c.b16 %v883, %v875
        %v964 = vpack.c.b16 %v884, %v876
        %v965 = vpack.c.b16 %v885, %v877
        %v966 = vpack.c.b16 %v886, %v878
        %v967 = vpack.c.b16 %v887, %v879
        %v968 = vpack.c.b16 %v888, %v880
        %v969 = vpack.c.b16 %v889, %v881
        %v970 = vpack.c.b16 %v890, %v882
        %v971 = vpack.c.b16 %v899, %v891
        %v972 = vpack.c.b16 %v900, %v892
        %v973 = vpack.c.b16 %v901, %v893
        %v974 = vpack.c.b16 %v902, %v894
        %v975 = vpack.c.b16 %v903, %v895
        %v976 = vpack.c.b16 %v904, %v896
        %v977 = vpack.c.b16 %v905, %v897
        %v978 = vpack.c.b16 %v906, %v898
        %v979 = vpack.c.b16 %v915, %v907
        %v980 = vpack.c.b16 %v916, %v908
        %v981 = vpack.c.b16 %v917, %v909
        %v982 = vpack.c.b16 %v918, %v910
        %v983 = vpack.c.b16 %v919, %v911
        %v984 = vpack.c.b16 %v920, %v912
        %v985 = vpack.c.b16 %v921, %v913
        %v986 = vpack.c.b16 %v922, %v914
        %1051 = vmatprep.subr.bf16.mxu0 %v980
        %1052 = vmatpush1.bf16.msra.mxu0 %v979
        %1053 = vmatprep.subr.bf16.mxu0 %v972
        %1054 = vmatpush1.bf16.msra.mxu0 %v971
        %1055 = vmatprep.subr.bf16.mxu0 %v964
        %1056 = vmatpush1.bf16.msra.mxu0 %v963
        %1057 = vmatprep.subr.bf16.mxu0 %v956
        %1058 = vmatpush1.bf16.msra.mxu0 %v955
        %1059 = vmatprep.subr.bf16.mxu0 %v948
        %1060 = vmatpush1.bf16.msra.mxu0 %v947
        %1061 = vmatprep.subr.bf16.mxu0 %v940
        %1062 = vmatpush1.bf16.msra.mxu0 %v939
        %1063 = vmatprep.subr.bf16.mxu0 %v932
        %1064 = vmatpush1.bf16.msra.mxu0 %v931
        %1065 = vmatprep.subr.bf16.mxu0 %v924
        %1066 = vmatpush1.bf16.msra.mxu0 %v923
        %1067 = vmatprep.subr.bf16.mxu0 0
        %1068 = vmatpush2.bf16.msra.mxu0 0
        %1069 = vmatprep.subr.bf16.mxu0 0
        %1070 = vmatpush2.bf16.msra.mxu0 0
        %1071 = vmatprep.subr.bf16.mxu0 0
        %1072 = vmatpush2.bf16.msra.mxu0 0
        %1073 = vmatprep.subr.bf16.mxu0 0
        %1074 = vmatpush2.bf16.msra.mxu0 0
        %1075 = vmatprep.subr.bf16.mxu0 0
        %1076 = vmatpush2.bf16.msra.mxu0 0
        %1077 = vmatprep.subr.bf16.mxu0 0
        %1078 = vmatpush2.bf16.msra.mxu0 0
        %1079 = vmatprep.subr.bf16.mxu0 0
        %1080 = vmatpush2.bf16.msra.mxu0 0
        %1081 = vmatprep.subr.bf16.mxu0 0
        %1082 = vmatpush2.bf16.msra.mxu0 0
        %1083 = vmatprep.mubr.bf16.mxu0 0
        %1084 = vmatmul.mubr.bf16.gmra.mxu0 %v624
        %v1085 = vpop.f32.mrf.mxu0
        %v1086 = vadd.f32 %v694, %v1085
        %v1087 = vpop.f32.mrf.mxu0
        %v1088 = vadd.f32 %v698, %v1087
        %v1089 = vpop.f32.mrf.mxu0
        %v1090 = vadd.f32 %v694, %v1089
        %v1091 = vpop.f32.mrf.mxu0
        %v1092 = vadd.f32 %v698, %v1091
        %1093 = vdwg.mxu0
        %1094 = vmatprep.subr.bf16.mxu0 %v982
        %1095 = vmatpush1.bf16.msra.mxu0 %v981
        %1096 = vmatprep.subr.bf16.mxu0 %v974
        %1097 = vmatpush1.bf16.msra.mxu0 %v973
        %1098 = vmatprep.subr.bf16.mxu0 %v966
        %1099 = vmatpush1.bf16.msra.mxu0 %v965
        %1100 = vmatprep.subr.bf16.mxu0 %v958
        %1101 = vmatpush1.bf16.msra.mxu0 %v957
        %1102 = vmatprep.subr.bf16.mxu0 %v950
        %1103 = vmatpush1.bf16.msra.mxu0 %v949
        %1104 = vmatprep.subr.bf16.mxu0 %v942
        %1105 = vmatpush1.bf16.msra.mxu0 %v941
        %1106 = vmatprep.subr.bf16.mxu0 %v934
        %1107 = vmatpush1.bf16.msra.mxu0 %v933
        %1108 = vmatprep.subr.bf16.mxu0 %v926
        %1109 = vmatpush1.bf16.msra.mxu0 %v925
        %1110 = vmatprep.subr.bf16.mxu0 0
        %1111 = vmatpush2.bf16.msra.mxu0 0
        %1112 = vmatprep.subr.bf16.mxu0 0
        %1113 = vmatpush2.bf16.msra.mxu0 0
        %1114 = vmatprep.subr.bf16.mxu0 0
        %1115 = vmatpush2.bf16.msra.mxu0 0
        %1116 = vmatprep.subr.bf16.mxu0 0
        %1117 = vmatpush2.bf16.msra.mxu0 0
        %1118 = vmatprep.subr.bf16.mxu0 0
        %1119 = vmatpush2.bf16.msra.mxu0 0
        %1120 = vmatprep.subr.bf16.mxu0 0
        %1121 = vmatpush2.bf16.msra.mxu0 0
        %1122 = vmatprep.subr.bf16.mxu0 0
        %1123 = vmatpush2.bf16.msra.mxu0 0
        %1124 = vmatprep.subr.bf16.mxu0 0
        %1125 = vmatpush2.bf16.msra.mxu0 0
        %1126 = vmatprep.mubr.bf16.mxu0 0
        %1127 = vmatmul.mubr.bf16.gmra.mxu0 %v624
        %v1128 = vpop.f32.mrf.mxu0
        %v1129 = vadd.f32 %v702, %v1128
        %v1130 = vpop.f32.mrf.mxu0
        %v1131 = vadd.f32 %v706, %v1130
        %v1132 = vpop.f32.mrf.mxu0
        %v1133 = vadd.f32 %v702, %v1132
        %v1134 = vpop.f32.mrf.mxu0
        %v1135 = vadd.f32 %v706, %v1134
        %1136 = vdwg.mxu0
        %1137 = vmatprep.subr.bf16.mxu0 %v984
        %1138 = vmatpush1.bf16.msra.mxu0 %v983
        %1139 = vmatprep.subr.bf16.mxu0 %v976
        %1140 = vmatpush1.bf16.msra.mxu0 %v975
        %1141 = vmatprep.subr.bf16.mxu0 %v968
        %1142 = vmatpush1.bf16.msra.mxu0 %v967
        %1143 = vmatprep.subr.bf16.mxu0 %v960
        %1144 = vmatpush1.bf16.msra.mxu0 %v959
        %1145 = vmatprep.subr.bf16.mxu0 %v952
        %1146 = vmatpush1.bf16.msra.mxu0 %v951
        %1147 = vmatprep.subr.bf16.mxu0 %v944
        %1148 = vmatpush1.bf16.msra.mxu0 %v943
        %1149 = vmatprep.subr.bf16.mxu0 %v936
        %1150 = vmatpush1.bf16.msra.mxu0 %v935
        %1151 = vmatprep.subr.bf16.mxu0 %v928
        %1152 = vmatpush1.bf16.msra.mxu0 %v927
        %1153 = vmatprep.subr.bf16.mxu0 0
        %1154 = vmatpush2.bf16.msra.mxu0 0
        %1155 = vmatprep.subr.bf16.mxu0 0
        %1156 = vmatpush2.bf16.msra.mxu0 0
        %1157 = vmatprep.subr.bf16.mxu0 0
        %1158 = vmatpush2.bf16.msra.mxu0 0
        %1159 = vmatprep.subr.bf16.mxu0 0
        %1160 = vmatpush2.bf16.msra.mxu0 0
        %1161 = vmatprep.subr.bf16.mxu0 0
        %1162 = vmatpush2.bf16.msra.mxu0 0
        %1163 = vmatprep.subr.bf16.mxu0 0
        %1164 = vmatpush2.bf16.msra.mxu0 0
        %1165 = vmatprep.subr.bf16.mxu0 0
        %1166 = vmatpush2.bf16.msra.mxu0 0
        %1167 = vmatprep.subr.bf16.mxu0 0
        %1168 = vmatpush2.bf16.msra.mxu0 0
        %1169 = vmatprep.mubr.bf16.mxu0 0
        %1170 = vmatmul.mubr.bf16.gmra.mxu0 %v624
        %v1171 = vpop.f32.mrf.mxu0
        %v1172 = vadd.f32 %v710, %v1171
        %v1173 = vpop.f32.mrf.mxu0
        %v1174 = vadd.f32 %v714, %v1173
        %v1175 = vpop.f32.mrf.mxu0
        %v1176 = vadd.f32 %v710, %v1175
        %v1177 = vpop.f32.mrf.mxu0
        %v1178 = vadd.f32 %v714, %v1177
        %1179 = vdwg.mxu0
        %1180 = vmatprep.subr.bf16.mxu0 %v986
        %1181 = vmatpush1.bf16.msra.mxu0 %v985
        %1182 = vmatprep.subr.bf16.mxu0 %v978
        %1183 = vmatpush1.bf16.msra.mxu0 %v977
        %1184 = vmatprep.subr.bf16.mxu0 %v970
        %1185 = vmatpush1.bf16.msra.mxu0 %v969
        %1186 = vmatprep.subr.bf16.mxu0 %v962
        %1187 = vmatpush1.bf16.msra.mxu0 %v961
        %1188 = vmatprep.subr.bf16.mxu0 %v954
        %1189 = vmatpush1.bf16.msra.mxu0 %v953
        %1190 = vmatprep.subr.bf16.mxu0 %v946
        %1191 = vmatpush1.bf16.msra.mxu0 %v945
        %1192 = vmatprep.subr.bf16.mxu0 %v938
        %1193 = vmatpush1.bf16.msra.mxu0 %v937
        %1194 = vmatprep.subr.bf16.mxu0 %v930
        %1195 = vmatpush1.bf16.msra.mxu0 %v929
        %1196 = vmatprep.subr.bf16.mxu0 0
        %1197 = vmatpush2.bf16.msra.mxu0 0
        %1198 = vmatprep.subr.bf16.mxu0 0
        %1199 = vmatpush2.bf16.msra.mxu0 0
        %1200 = vmatprep.subr.bf16.mxu0 0
        %1201 = vmatpush2.bf16.msra.mxu0 0
        %1202 = vmatprep.subr.bf16.mxu0 0
        %1203 = vmatpush2.bf16.msra.mxu0 0
        %1204 = vmatprep.subr.bf16.mxu0 0
        %1205 = vmatpush2.bf16.msra.mxu0 0
        %1206 = vmatprep.subr.bf16.mxu0 0
        %1207 = vmatpush2.bf16.msra.mxu0 0
        %1208 = vmatprep.subr.bf16.mxu0 0
        %1209 = vmatpush2.bf16.msra.mxu0 0
        %1210 = vmatprep.subr.bf16.mxu0 0
        %1211 = vmatpush2.bf16.msra.mxu0 0
        %1212 = vmatprep.mubr.bf16.mxu0 0
        %1213 = vmatmul.mubr.bf16.gmra.mxu0 %v624
        %v1214 = vpop.f32.mrf.mxu0
        %v1215 = vadd.f32 %v718, %v1214
        %v1216 = vpop.f32.mrf.mxu0
        %v1217 = vadd.f32 %v722, %v1216
        %v1218 = vpop.f32.mrf.mxu0
        %v1219 = vadd.f32 %v718, %v1218
        %v1220 = vpop.f32.mrf.mxu0
        %v1221 = vadd.f32 %v722, %v1220
        %1222 = vdwg.mxu0
        %vm1223 = vcmp.ge.f32.partialorder %v1086, 0.0
        %vm1224 = vcmp.ge.f32.partialorder %v1088, 0.0
        %vm1225 = vcmp.ge.f32.partialorder %v1129, 0.0
        %vm1226 = vcmp.ge.f32.partialorder %v1131, 0.0
        %vm1227 = vcmp.ge.f32.partialorder %v1172, 0.0
        %vm1228 = vcmp.ge.f32.partialorder %v1174, 0.0
        %vm1229 = vcmp.ge.f32.partialorder %v1215, 0.0
        %vm1230 = vcmp.ge.f32.partialorder %v1217, 0.0
        %vm1231 = vcmp.ge.f32.partialorder %v1090, 0.0
        %vm1232 = vcmp.ge.f32.partialorder %v1092, 0.0
        %vm1233 = vcmp.ge.f32.partialorder %v1133, 0.0
        %vm1234 = vcmp.ge.f32.partialorder %v1135, 0.0
        %vm1235 = vcmp.ge.f32.partialorder %v1176, 0.0
        %vm1236 = vcmp.ge.f32.partialorder %v1178, 0.0
        %vm1237 = vcmp.ge.f32.partialorder %v1219, 0.0
        %vm1238 = vcmp.ge.f32.partialorder %v1221, 0.0
        %v1239 = vmul.f32 %v1086, 0.2
        %v1240 = vmul.f32 %v1088, 0.2
        %v1241 = vmul.f32 %v1129, 0.2
        %v1242 = vmul.f32 %v1131, 0.2
        %v1243 = vmul.f32 %v1172, 0.2
        %v1244 = vmul.f32 %v1174, 0.2
        %v1245 = vmul.f32 %v1215, 0.2
        %v1246 = vmul.f32 %v1217, 0.2
        %v1247 = vmul.f32 %v1090, 0.2
        %v1248 = vmul.f32 %v1092, 0.2
        %v1249 = vmul.f32 %v1133, 0.2
        %v1250 = vmul.f32 %v1135, 0.2
        %v1251 = vmul.f32 %v1176, 0.2
        %v1252 = vmul.f32 %v1178, 0.2
        %v1253 = vmul.f32 %v1219, 0.2
        %v1254 = vmul.f32 %v1221, 0.2
        %v1255 = vsel %vm1223, %v1086, %v1239
        %v1256 = vsel %vm1224, %v1088, %v1240
        %v1257 = vsel %vm1225, %v1129, %v1241
        %v1258 = vsel %vm1226, %v1131, %v1242
        %v1259 = vsel %vm1227, %v1172, %v1243
        %v1260 = vsel %vm1228, %v1174, %v1244
        %v1261 = vsel %vm1229, %v1215, %v1245
        %v1262 = vsel %vm1230, %v1217, %v1246
        %v1263 = vsel %vm1231, %v1090, %v1247
        %v1264 = vsel %vm1232, %v1092, %v1248
        %v1265 = vsel %vm1233, %v1133, %v1249
        %v1266 = vsel %vm1234, %v1135, %v1250
        %v1267 = vsel %vm1235, %v1176, %v1251
        %v1268 = vsel %vm1236, %v1178, %v1252
        %v1269 = vsel %vm1237, %v1219, %v1253
        %v1270 = vsel %vm1238, %v1221, %v1254
        %1271 = vst [vmem:[%s313] sm:$0xff] %v1255
        %1272 = vst [vmem:[%s313 + $0x8] sm:$0xff] %v1256
        %1273 = vst [vmem:[%s313 + $0x10] sm:$0xff] %v1257
        %1274 = vst [vmem:[%s313 + $0x18] sm:$0xff] %v1258
        %1275 = vst [vmem:[%s313 + $0x20] sm:$0xff] %v1259
        %1276 = vst [vmem:[%s313 + $0x28] sm:$0xff] %v1260
        %1277 = vst [vmem:[%s313 + $0x30] sm:$0xff] %v1261
        %1278 = vst [vmem:[%s313 + $0x38] sm:$0xff] %v1262
        %1279 = vst [vmem:[%s313 + $0x40] sm:$0xff] %v1263
        %1280 = vst [vmem:[%s313 + $0x48] sm:$0xff] %v1264
        %1281 = vst [vmem:[%s313 + $0x50] sm:$0xff] %v1265
        %1282 = vst [vmem:[%s313 + $0x58] sm:$0xff] %v1266
        %1283 = vst [vmem:[%s313 + $0x60] sm:$0xff] %v1267
        %1284 = vst [vmem:[%s313 + $0x68] sm:$0xff] %v1268
        %1285 = vst [vmem:[%s313 + $0x70] sm:$0xff] %v1269
        %1286 = vst [vmem:[%s313 + $0x78] sm:$0xff] %v1270
        %s1287 = sand.u32 %s208, 1
        %s1288 = scalar_lea.sflag [#allocation3], %s1287
        %s1289 = sand.u32 %s208, 1
        %s1290 = smul.addr %s1289, 128
        %s1291 = scalar_lea.vmem [#allocation2], %s1290
        // Predicated region
        $region53: #{gcn_feature_extractor.1} parent=51 // pred_check
          %p1292 = pneg %p218
        $region54: #{gcn_feature_extractor.1} parent=51 // pred_check_branch
          %1294 = sbr.rel (%p1292) target = $region56
        $region55: #{gcn_feature_extractor.1} parent=51 // pred_region
          %s1296 = ssub.s32 2048, 2048
          %1297 = vsyncadd %s1288, %s1296
          %s1298 = smul.addr %s22, 16
          %s1299 = smul.addr %s1298, 128
          %s1300 = scalar_lea.hbm %s8, %s1299
          %s1301 = sshll.u32 %s1291, 4
          %s1302 = int_to_ptr.vmem [resolvable:$true] %s1301
          %1307 = dma.vmem_to_hbm [thread:$0]  %s1302, 2048, %s1300, %s1288, 1024, 1024, 64
        $region56: #{gcn_feature_extractor.1} parent=51 // pred_fallthru
          _
      $region52: #{gcn_feature_extractor.1} parent=5 // pred_fallthru
        _
      %p1308 = scmp.le.s32.totalorder 2, %s17
      // Predicated region
      $region57: #{gcn_feature_extractor.1} parent=5 // pred_check
        %p1309 = pneg %p1308
      $region58: #{gcn_feature_extractor.1} parent=5 // pred_check_branch
        %1311 = sbr.rel (%p1309) target = $region60
      $region59: #{gcn_feature_extractor.1} parent=5 // pred_region
        %s1312 = ssub.s32 %s17, 2
        // Predicated region
        $region61: #{gcn_feature_extractor.1} parent=59 // pred_check
          %p1313 = pneg %p224
        $region62: #{gcn_feature_extractor.1} parent=59 // pred_check_branch
          %1315 = sbr.rel (%p1313) target = $region64
        $region63: #{gcn_feature_extractor.1} parent=59 // pred_region
          %s1316 = sand.u32 %s209, 1
          %s1317 = scalar_lea.sflag [#allocation3], %s1316
          %s1318 = sand.u32 %s209, 1
          %s1319 = smul.addr %s1318, 128
          %s1320 = scalar_lea.vmem [#allocation2], %s1319
          %1321 = dma.done %s1317, 2048
        $region64: #{gcn_feature_extractor.1} parent=59 // pred_fallthru
          _
      $region60: #{gcn_feature_extractor.1} parent=5 // pred_fallthru
        _
    $region6: #{gcn_feature_extractor.1} parent=1 // loop_footer
      %s21 = sadd.s32 1, %s17
    $region7: #{gcn_feature_extractor.1} parent=1 // loop_footer_branch
      %16 = sbr.rel target = $region3
    $region8: #{gcn_feature_extractor.1} parent=1 // loop_exit
      _
    %1322 = vsyncpa [#allocation3], 1
    %s1323 = scalar_lea.sflag [#allocation3], 1
    %1324 = vsyncpa %s1323, 1

</llo_original>
